<compile_context>
chip_gen: v6e
topology: v6e:2x2x1
jax: 0.10.0
libtpu: 0.0.40
codegen_flags: <defaults>
</compile_context>

<pallas_src>
import math

import jax
import jax.numpy as jnp
from jax import lax
from jax.experimental import pallas as pl
from jax.experimental.pallas import tpu as pltpu

D_MODEL = 32
VOCAB_SIZE = 8
PE_MAX_LEN = 2000   # PositionalEncoding default max_len
LANES = 128
TOK_PER_ROW = LANES // D_MODEL   # 4 tokens per 128-lane packed row


def _build_positional_encoding(max_len: int, d_model: int) -> jnp.ndarray:
    """Same buffer as PositionalEncoding.pe, shape (max_len, d_model)."""
    position = jnp.arange(max_len, dtype=jnp.float32)[:, None]                    # (L, 1)
    div_term = jnp.exp(
        jnp.arange(0, d_model, 2, dtype=jnp.float32) * (-math.log(10000.0) / d_model)
    )                                                                              # (D/2,)
    angles = position * div_term                                                   # (L, D/2)
    pe = jnp.zeros((max_len, d_model), dtype=jnp.float32)
    pe = pe.at[:, 0::2].set(jnp.sin(angles))
    pe = pe.at[:, 1::2].set(jnp.cos(angles))
    return pe


def _embedding_kernel(ids_ref, table_ref, pe_ref, out_ref):
    """Byte-packed id decode + 3-bit binary select tree + PE add (all VPU).

    ids_ref   : (tb, S_rows, 1)   int32 — 4 token ids byte-packed per word
    table_ref : (8, 128)          f32   — embedding rows tiled 4x across lanes
    pe_ref    : (S_rows, 128)     f32   — PE for one sequence, lane-dense packed
    out_ref   : (tb, S_rows, 128) f32
    """
    packed = ids_ref[...]                                   # (tb, S_rows, 1)

    # Which token of the 4-token group each lane belongs to (lane // 32, 0..3).
    lane = lax.broadcasted_iota(jnp.int32, (1, 1, LANES), 2)
    tok = lane >> 5                                          # (1, 1, 128), narrow

    # Per-byte decode: constant shifts stay lane-narrow; 3 full-width selects
    # expand the right byte onto each lane group.
    b0 = packed & 0xFF
    b1 = (packed >> 8) & 0xFF
    b2 = (packed >> 16) & 0xFF
    b3 = (packed >> 24) & 0xFF
    ids = jnp.where(tok == 0, b0,
          jnp.where(tok == 1, b1,
          jnp.where(tok == 2, b2, b3)))                      # (tb, S_rows, 128)

    # 3-level binary select tree over the 8 table rows (only low 3 id bits used).
    bit0 = (ids & 1) != 0
    bit1 = (ids & 2) != 0
    bit2 = (ids & 4) != 0
    t = table_ref[...]                                       # (8, 128)
    s01 = jnp.where(bit0, t[1], t[0])
    s23 = jnp.where(bit0, t[3], t[2])
    s45 = jnp.where(bit0, t[5], t[4])
    s67 = jnp.where(bit0, t[7], t[6])
    lo = jnp.where(bit1, s23, s01)
    hi = jnp.where(bit1, s67, s45)
    emb = jnp.where(bit2, hi, lo)                            # (tb, S_rows, 128)

    # Single fused add with the VMEM-resident PE (broadcast over the batch dim)
    # and one unmasked, lane-dense store.
    out_ref[...] = emb + pe_ref[...]


def embedding_layer_forward(input_ids: jnp.ndarray,
                            emb_table: jnp.ndarray,
                            pe_table: jnp.ndarray) -> jnp.ndarray:
    """EmbeddingLayer.forward: src_emb(input_ids) + pe[:S] (broadcast over batch) -> (B, S, D)."""
    B, S = input_ids.shape
    V, D = emb_table.shape
    assert D == D_MODEL and LANES % D == 0
    assert V <= 8, "select tree assumes 3-bit token ids"

    # --- pad sequence to a multiple of 4 tokens and byte-pack ids (4 B / 4 tokens) ---
    S_pad = pl.cdiv(S, TOK_PER_ROW) * TOK_PER_ROW
    S_rows = S_pad // TOK_PER_ROW
    # Contract: only the low 3 bits of each id are used (nn.Embedding OOB ids are UB anyway).
    ids = input_ids.astype(jnp.int32) & 0x7
    if S_pad != S:
        ids = jnp.pad(ids, ((0, 0), (0, S_pad - S)))

    # --- batch tile: ~512 rows per block, >= 2 grid blocks when B >= 2 (v7x 2 TCs) ---
    tb = max(1, min(B, 512 // max(S_rows, 1)))
    if B >= 2:
        tb = min(tb, max(1, B // 2))
    B_pad = pl.cdiv(B, tb) * tb
    if B_pad != B:
        ids = jnp.pad(ids, ((0, B_pad - B), (0, 0)))

    ids4 = ids.reshape(B_pad, S_rows, TOK_PER_ROW)
    byte_weights = jnp.array([1 << (8 * t) for t in range(TOK_PER_ROW)], dtype=jnp.int32)
    ids_packed = (ids4 * byte_weights).sum(axis=-1).astype(jnp.int32)[..., None]  # (B_pad, S_rows, 1)

    # --- PE for ONE sequence, lane-dense packed (no per-batch tiling) ---
    pe_seq = pe_table[:min(S_pad, pe_table.shape[0])].astype(jnp.float32)
    if pe_seq.shape[0] < S_pad:
        pe_seq = jnp.pad(pe_seq, ((0, S_pad - pe_seq.shape[0]), (0, 0)))
    pe_packed = pe_seq.reshape(S_rows, LANES)                                      # (S_rows, 128)

    # Embedding table tiled across the 4 token slots of a 128-lane row, padded to 8 rows.
    table = emb_table.astype(jnp.float32)
    if V < 8:
        table = jnp.pad(table, ((0, 8 - V), (0, 0)))
    table_tiled = jnp.tile(table, (1, TOK_PER_ROW))                                # (8, 128)

    grid = (B_pad // tb,)
    # Per-block VMEM: output tb*S_rows*512 B (x2 buffers) + resident PE (<=256 KB for
    # max_len=2000) + tiny ids/table -> ~1 MB, well inside every generation's budget.
    # TODO(synk): for sequences far beyond max_len=2000, also tile the sequence axis.
    out_packed = pl.pallas_call(
        _embedding_kernel,
        out_shape=jax.ShapeDtypeStruct((B_pad, S_rows, LANES), jnp.float32),
        grid=grid,
        in_specs=[
            pl.BlockSpec((tb, S_rows, 1), lambda i: (i, 0, 0)),    # packed ids (compact)
            pl.BlockSpec((8, LANES), lambda i: (0, 0)),            # table: fetched once, resident
            pl.BlockSpec((S_rows, LANES), lambda i: (0, 0)),       # PE: fetched once, resident
        ],
        out_specs=pl.BlockSpec((tb, S_rows, LANES), lambda i: (i, 0, 0)),
        compiler_params=pltpu.CompilerParams(dimension_semantics=("parallel",)),
    )(ids_packed, table_tiled, pe_packed)

    # TODO(synk): nn.Dropout(p=0.2) is identity in eval mode; training-mode dropout not applied.
    return out_packed.reshape(B_pad, S_pad, D)[:B, :S, :]


if __name__ == "__main__":
    key = jax.random.PRNGKey(0)
    k_ids, k_emb = jax.random.split(key)

    batch, seq = 2, 8
    input_ids = jax.random.randint(k_ids, (batch, seq), 0, VOCAB_SIZE, dtype=jnp.int32)

    # nn.Embedding default init: N(0, 1)
    emb_table = jax.random.normal(k_emb, (VOCAB_SIZE, D_MODEL), dtype=jnp.float32)
    pe_table = _build_positional_encoding(PE_MAX_LEN, D_MODEL)

    out = embedding_layer_forward(input_ids, emb_table, pe_table)
    out = jax.block_until_ready(out)

    # Pure-JAX reference: gather + positional add (eval-mode dropout is identity,
    # and the original module applies no sqrt(d_model) scaling).
    ref = jnp.take(emb_table, input_ids, axis=0) + pe_table[:seq, :][None, :, :]
    assert out.shape == (batch, seq, D_MODEL)
    assert jnp.allclose(out, ref, atol=1e-5, rtol=1e-5)

    print("KERNEL_OK")
</pallas_src>

<mosaic_0001>
module attributes {stable_mosaic.version = 11 : i64} {
  func.func @_embedding_kernel(%arg0: i32, %arg1: memref<1x2x1xi32, #tpu.memory_space<vmem>>, %arg2: memref<8x128xf32, #tpu.memory_space<vmem>>, %arg3: memref<2x128xf32, #tpu.memory_space<vmem>>, %arg4: memref<1x2x128xf32, #tpu.memory_space<vmem>>) attributes {dimension_semantics = [#tpu.dimension_semantics<parallel>], iteration_bounds = array<i64: 2>, scalar_prefetch = 0 : i64, scratch_operands = 0 : i64, tpu.core_type = #tpu.core_type<tc>, window_params = [{transform_indices = @transform_0, window_bounds = array<i64: 1, 2, 1>}, {pipeline_mode = #tpu.pipeline_mode<synchronous>, transform_indices = @transform_1, window_bounds = array<i64: 8, 128>}, {pipeline_mode = #tpu.pipeline_mode<synchronous>, transform_indices = @transform_2, window_bounds = array<i64: 2, 128>}, {transform_indices = @transform_3, window_bounds = array<i64: 1, 2, 128>}]} {
    %c0 = arith.constant 0 : index
    %c0_0 = arith.constant 0 : index
    %c0_1 = arith.constant 0 : index
    %0 = vector.load %arg1[%c0, %c0_0, %c0_1] : memref<1x2x1xi32, #tpu.memory_space<vmem>>, vector<1x2x1xi32>
    %1 = tpu.iota {dimensions = array<i32: 2>} : vector<1x1x128xi32>
    %c5_i32 = arith.constant 5 : i32
    %2 = vector.broadcast %c5_i32 : i32 to vector<1x1x128xi32>
    %3 = arith.shrsi %1, %2 : vector<1x1x128xi32>
    %c255_i32 = arith.constant 255 : i32
    %4 = vector.broadcast %c255_i32 : i32 to vector<1x2x1xi32>
    %5 = arith.andi %0, %4 : vector<1x2x1xi32>
    %c8_i32 = arith.constant 8 : i32
    %6 = vector.broadcast %c8_i32 : i32 to vector<1x2x1xi32>
    %7 = arith.shrsi %0, %6 : vector<1x2x1xi32>
    %c255_i32_2 = arith.constant 255 : i32
    %8 = vector.broadcast %c255_i32_2 : i32 to vector<1x2x1xi32>
    %9 = arith.andi %7, %8 : vector<1x2x1xi32>
    %c16_i32 = arith.constant 16 : i32
    %10 = vector.broadcast %c16_i32 : i32 to vector<1x2x1xi32>
    %11 = arith.shrsi %0, %10 : vector<1x2x1xi32>
    %c255_i32_3 = arith.constant 255 : i32
    %12 = vector.broadcast %c255_i32_3 : i32 to vector<1x2x1xi32>
    %13 = arith.andi %11, %12 : vector<1x2x1xi32>
    %c24_i32 = arith.constant 24 : i32
    %14 = vector.broadcast %c24_i32 : i32 to vector<1x2x1xi32>
    %15 = arith.shrsi %0, %14 : vector<1x2x1xi32>
    %c255_i32_4 = arith.constant 255 : i32
    %16 = vector.broadcast %c255_i32_4 : i32 to vector<1x2x1xi32>
    %17 = arith.andi %15, %16 : vector<1x2x1xi32>
    %c0_i32 = arith.constant 0 : i32
    %18 = vector.broadcast %c0_i32 : i32 to vector<1x1x128xi32>
    %19 = arith.cmpi eq, %3, %18 : vector<1x1x128xi32>
    %c1_i32 = arith.constant 1 : i32
    %20 = vector.broadcast %c1_i32 : i32 to vector<1x1x128xi32>
    %21 = arith.cmpi eq, %3, %20 : vector<1x1x128xi32>
    %c2_i32 = arith.constant 2 : i32
    %22 = vector.broadcast %c2_i32 : i32 to vector<1x1x128xi32>
    %23 = arith.cmpi eq, %3, %22 : vector<1x1x128xi32>
    %24 = vector.shape_cast %23 : vector<1x1x128xi1> to vector<1x1x128xi1>
    %25 = vector.broadcast %24 : vector<1x1x128xi1> to vector<1x2x128xi1>
    %26 = vector.shape_cast %13 : vector<1x2x1xi32> to vector<1x2x1xi32>
    %27 = vector.broadcast %26 : vector<1x2x1xi32> to vector<1x2x128xi32>
    %28 = vector.shape_cast %17 : vector<1x2x1xi32> to vector<1x2x1xi32>
    %29 = vector.broadcast %28 : vector<1x2x1xi32> to vector<1x2x128xi32>
    %30 = arith.select %25, %27, %29 : vector<1x2x128xi1>, vector<1x2x128xi32>
    %31 = vector.shape_cast %21 : vector<1x1x128xi1> to vector<1x1x128xi1>
    %32 = vector.broadcast %31 : vector<1x1x128xi1> to vector<1x2x128xi1>
    %33 = vector.shape_cast %9 : vector<1x2x1xi32> to vector<1x2x1xi32>
    %34 = vector.broadcast %33 : vector<1x2x1xi32> to vector<1x2x128xi32>
    %35 = arith.select %32, %34, %30 : vector<1x2x128xi1>, vector<1x2x128xi32>
    %36 = vector.shape_cast %19 : vector<1x1x128xi1> to vector<1x1x128xi1>
    %37 = vector.broadcast %36 : vector<1x1x128xi1> to vector<1x2x128xi1>
    %38 = vector.shape_cast %5 : vector<1x2x1xi32> to vector<1x2x1xi32>
    %39 = vector.broadcast %38 : vector<1x2x1xi32> to vector<1x2x128xi32>
    %40 = arith.select %37, %39, %35 : vector<1x2x128xi1>, vector<1x2x128xi32>
    %c1_i32_5 = arith.constant 1 : i32
    %41 = vector.broadcast %c1_i32_5 : i32 to vector<1x2x128xi32>
    %42 = arith.andi %40, %41 : vector<1x2x128xi32>
    %c0_i32_6 = arith.constant 0 : i32
    %43 = vector.broadcast %c0_i32_6 : i32 to vector<1x2x128xi32>
    %44 = arith.cmpi ne, %42, %43 : vector<1x2x128xi32>
    %c2_i32_7 = arith.constant 2 : i32
    %45 = vector.broadcast %c2_i32_7 : i32 to vector<1x2x128xi32>
    %46 = arith.andi %40, %45 : vector<1x2x128xi32>
    %c0_i32_8 = arith.constant 0 : i32
    %47 = vector.broadcast %c0_i32_8 : i32 to vector<1x2x128xi32>
    %48 = arith.cmpi ne, %46, %47 : vector<1x2x128xi32>
    %c4_i32 = arith.constant 4 : i32
    %49 = vector.broadcast %c4_i32 : i32 to vector<1x2x128xi32>
    %50 = arith.andi %40, %49 : vector<1x2x128xi32>
    %c0_i32_9 = arith.constant 0 : i32
    %51 = vector.broadcast %c0_i32_9 : i32 to vector<1x2x128xi32>
    %52 = arith.cmpi ne, %50, %51 : vector<1x2x128xi32>
    %c0_10 = arith.constant 0 : index
    %c0_11 = arith.constant 0 : index
    %53 = vector.load %arg2[%c0_10, %c0_11] : memref<8x128xf32, #tpu.memory_space<vmem>>, vector<8x128xf32>
    %54 = vector.extract_strided_slice %53 {offsets = [1, 0], sizes = [1, 128], strides = [1, 1]} : vector<8x128xf32> to vector<1x128xf32>
    %55 = vector.shape_cast %54 : vector<1x128xf32> to vector<128xf32>
    %56 = vector.extract_strided_slice %53 {offsets = [0, 0], sizes = [1, 128], strides = [1, 1]} : vector<8x128xf32> to vector<1x128xf32>
    %57 = vector.shape_cast %56 : vector<1x128xf32> to vector<128xf32>
    %58 = vector.shape_cast %55 : vector<128xf32> to vector<1x1x128xf32>
    %59 = vector.broadcast %58 : vector<1x1x128xf32> to vector<1x2x128xf32>
    %60 = vector.shape_cast %57 : vector<128xf32> to vector<1x1x128xf32>
    %61 = vector.broadcast %60 : vector<1x1x128xf32> to vector<1x2x128xf32>
    %62 = arith.select %44, %59, %61 : vector<1x2x128xi1>, vector<1x2x128xf32>
    %63 = vector.extract_strided_slice %53 {offsets = [3, 0], sizes = [1, 128], strides = [1, 1]} : vector<8x128xf32> to vector<1x128xf32>
    %64 = vector.shape_cast %63 : vector<1x128xf32> to vector<128xf32>
    %65 = vector.extract_strided_slice %53 {offsets = [2, 0], sizes = [1, 128], strides = [1, 1]} : vector<8x128xf32> to vector<1x128xf32>
    %66 = vector.shape_cast %65 : vector<1x128xf32> to vector<128xf32>
    %67 = vector.shape_cast %64 : vector<128xf32> to vector<1x1x128xf32>
    %68 = vector.broadcast %67 : vector<1x1x128xf32> to vector<1x2x128xf32>
    %69 = vector.shape_cast %66 : vector<128xf32> to vector<1x1x128xf32>
    %70 = vector.broadcast %69 : vector<1x1x128xf32> to vector<1x2x128xf32>
    %71 = arith.select %44, %68, %70 : vector<1x2x128xi1>, vector<1x2x128xf32>
    %72 = vector.extract_strided_slice %53 {offsets = [5, 0], sizes = [1, 128], strides = [1, 1]} : vector<8x128xf32> to vector<1x128xf32>
    %73 = vector.shape_cast %72 : vector<1x128xf32> to vector<128xf32>
    %74 = vector.extract_strided_slice %53 {offsets = [4, 0], sizes = [1, 128], strides = [1, 1]} : vector<8x128xf32> to vector<1x128xf32>
    %75 = vector.shape_cast %74 : vector<1x128xf32> to vector<128xf32>
    %76 = vector.shape_cast %73 : vector<128xf32> to vector<1x1x128xf32>
    %77 = vector.broadcast %76 : vector<1x1x128xf32> to vector<1x2x128xf32>
    %78 = vector.shape_cast %75 : vector<128xf32> to vector<1x1x128xf32>
    %79 = vector.broadcast %78 : vector<1x1x128xf32> to vector<1x2x128xf32>
    %80 = arith.select %44, %77, %79 : vector<1x2x128xi1>, vector<1x2x128xf32>
    %81 = vector.extract_strided_slice %53 {offsets = [7, 0], sizes = [1, 128], strides = [1, 1]} : vector<8x128xf32> to vector<1x128xf32>
    %82 = vector.shape_cast %81 : vector<1x128xf32> to vector<128xf32>
    %83 = vector.extract_strided_slice %53 {offsets = [6, 0], sizes = [1, 128], strides = [1, 1]} : vector<8x128xf32> to vector<1x128xf32>
    %84 = vector.shape_cast %83 : vector<1x128xf32> to vector<128xf32>
    %85 = vector.shape_cast %82 : vector<128xf32> to vector<1x1x128xf32>
    %86 = vector.broadcast %85 : vector<1x1x128xf32> to vector<1x2x128xf32>
    %87 = vector.shape_cast %84 : vector<128xf32> to vector<1x1x128xf32>
    %88 = vector.broadcast %87 : vector<1x1x128xf32> to vector<1x2x128xf32>
    %89 = arith.select %44, %86, %88 : vector<1x2x128xi1>, vector<1x2x128xf32>
    %90 = arith.select %48, %71, %62 : vector<1x2x128xi1>, vector<1x2x128xf32>
    %91 = arith.select %48, %89, %80 : vector<1x2x128xi1>, vector<1x2x128xf32>
    %92 = arith.select %52, %91, %90 : vector<1x2x128xi1>, vector<1x2x128xf32>
    %c0_12 = arith.constant 0 : index
    %c0_13 = arith.constant 0 : index
    %93 = vector.load %arg3[%c0_12, %c0_13] : memref<2x128xf32, #tpu.memory_space<vmem>>, vector<2x128xf32>
    %94 = vector.shape_cast %93 : vector<2x128xf32> to vector<1x2x128xf32>
    %95 = arith.addf %92, %94 : vector<1x2x128xf32>
    %c0_14 = arith.constant 0 : index
    %c0_15 = arith.constant 0 : index
    %c0_16 = arith.constant 0 : index
    %96 = vector.load %arg4[%c0_14, %c0_15, %c0_16] : memref<1x2x128xf32, #tpu.memory_space<vmem>>, vector<1x2x128xf32>
    tpu.vector_store %arg4[%c0_14, %c0_15, %c0_16], %95 {strides = array<i32>} : memref<1x2x128xf32, #tpu.memory_space<vmem>>, vector<1x2x128xf32>,
    return
  }
  func.func @transform_0(%arg0: i32) -> (i32, i32, i32) {
    %c0_i32 = arith.constant 0 : i32
    %c0_i32_0 = arith.constant 0 : i32
    %c0_i32_1 = arith.constant 0 : i32
    return %arg0, %c0_i32, %c0_i32_0 : i32, i32, i32
  }
  func.func @transform_1(%arg0: i32) -> (i32, i32) {
    %c0_i32 = arith.constant 0 : i32
    %c0_i32_0 = arith.constant 0 : i32
    %c0_i32_1 = arith.constant 0 : i32
    return %c0_i32, %c0_i32_0 : i32, i32
  }
  func.func @transform_2(%arg0: i32) -> (i32, i32) {
    %c0_i32 = arith.constant 0 : i32
    %c0_i32_0 = arith.constant 0 : i32
    %c0_i32_1 = arith.constant 0 : i32
    return %c0_i32, %c0_i32_0 : i32, i32
  }
  func.func @transform_3(%arg0: i32) -> (i32, i32, i32) {
    %c0_i32 = arith.constant 0 : i32
    %c0_i32_0 = arith.constant 0 : i32
    %c0_i32_1 = arith.constant 0 : i32
    return %arg0, %c0_i32, %c0_i32_0 : i32, i32, i32
  }
}

</mosaic_0001>

<llo_original>
// kernel: tpu_custom_call.1
$region0: #{tpu_custom_call.1}
  #allocation0 [shape = 'u32[]', space=smem, size = 0x4, offset = 0x4, fixed_abs, tag = 'smem constant byte address 0x4 - core index']
  #allocation1 [shape = 'u32[144,128]{1,0:T(1,128)}', space=vmem, size = 0x12000, scoped, tag = 'internal scratch']
  %s0 = inlined_call_operand.vmem [shape: s32[2,2,1], index: 0, kind: input, shape index: {}]
  %s1 = inlined_call_operand.hbm [shape: f32[8,128], index: 1, kind: input, shape index: {}]
  %s2 = inlined_call_operand.vmem [shape: f32[2,128], index: 2, kind: input, shape index: {}]
  %s3 = inlined_call_operand.hbm [shape: f32[2,2,128], index: 3, kind: output, shape index: {}]
  %s4 = sld [smem:[#allocation0]]
  $region49: #{tpu_custom_call.1} parent=0
    _
  %s6 = ssub.s32 1, %s4
  %s7 = scalar_select 0, %s6, %s4
  $region1: #{tpu_custom_call.1} parent=0
    #allocation2 [shape = 'u8[4096]{0}', space=vmem, size = 0x1000, scoped, tag = 'input window, operand 1, single buffered']
    #allocation3 [shape = 's32[2]{0}', space=sflag, size = 0x8, scoped, tag = 'scoped memory for tpu_custom_call.1']
    #allocation4 [shape = 's32[2]{0}', space=sflag, size = 0x8, scoped, tag = 'scoped memory for tpu_custom_call.1']
    #allocation5 [shape = 'u8[2048]{0}', space=vmem, size = 0x800, scoped, tag = 'output window, operand 0']
    %8 = vsyncpa [#allocation3], 0
    %9 = vsyncpa [#allocation4], 0
    %s10 = scalar_lea.sflag [#allocation4], 1
    %11 = vsyncpa %s10, 0
    loop: start=0, step=1, limit=4
    $region2: #{tpu_custom_call.1} parent=1 // loop_pre_header
      _
    $region3: #{tpu_custom_call.1} parent=1 // loop_header
      %s13 = sphi 0, %s17
      %p14 = scmp.ge.s32.totalorder %s13, 4
      %s23 = sphi 0, %s25
      %s26 = sphi 0, %s23
      %s27 = sphi 0, %s26
      %s43 = sphi 0, %s27
      %s47 = sphi 0, %s47
      %s49 = sphi 0, %s47
      %s50 = sphi 0, %s49
      %s64 = sphi 0, %s50
      %s68 = sphi 0, %s68
      %s70 = sphi 0, %s68
      %s71 = sphi 0, %s70
      %s85 = sphi 0, %s71
      %s91 = sphi 0, %s93
      %s94 = sphi 0, %s91
      %s95 = sphi 0, %s94
      %s111 = sphi 0, %s95
    $region4: #{tpu_custom_call.1} parent=1 // loop_header_branch
      %16 = sbr.rel (%p14) target = $region8
    $region5: #{tpu_custom_call.1} parent=1 // loop_body
      %s18 = ssub.s32 %s13, 1
      %s19 = ssub.s32 %s13, 2
      %s20 = sadd.s32 %s13, 1
      %s21 = ssub.s32 %s13, %s20
      %p22 = scmp.eq.s32.totalorder %s21, 0
      %s24 = sadd.s32 %s23, 1
      %s25 = scalar_select %p22, %s23, %s24
      %p28 = pneg %p22
      %p29 = scmp.eq.s32.totalorder %s13, 1
      %p30 = por %p28, %p29
      %p31 = scmp.ne.s32.totalorder %s23, %s26
      %p32 = scmp.eq.s32.totalorder %s13, 0
      %p33 = por %p31, %p32
      %p34 = scmp.ne.s32.totalorder %s23, %s26
      %p35 = scmp.eq.s32.totalorder %s18, 1
      %p36 = por %p34, %p35
      %p37 = scmp.ne.s32.totalorder %s26, %s27
      %p38 = scmp.eq.s32.totalorder %s18, 0
      %p39 = por %p37, %p38
      %p40 = scmp.ne.s32.totalorder %s26, %s27
      %p41 = scmp.eq.s32.totalorder %s19, 1
      %p42 = por %p40, %p41
      %p44 = scmp.ne.s32.totalorder %s27, %s43
      %p45 = scmp.eq.s32.totalorder %s19, 0
      %p46 = por %p44, %p45
      %s48 = sadd.s32 %s47, 1
      %p51 = scmp.eq.s32.totalorder %s13, 1
      %p52 = scmp.ne.s32.totalorder %s47, %s49
      %p53 = scmp.eq.s32.totalorder %s13, 0
      %p54 = por %p52, %p53
      %p55 = scmp.ne.s32.totalorder %s47, %s49
      %p56 = scmp.eq.s32.totalorder %s18, 1
      %p57 = por %p55, %p56
      %p58 = scmp.ne.s32.totalorder %s49, %s50
      %p59 = scmp.eq.s32.totalorder %s18, 0
      %p60 = por %p58, %p59
      %p61 = scmp.ne.s32.totalorder %s49, %s50
      %p62 = scmp.eq.s32.totalorder %s19, 1
      %p63 = por %p61, %p62
      %p65 = scmp.ne.s32.totalorder %s50, %s64
      %p66 = scmp.eq.s32.totalorder %s19, 0
      %p67 = por %p65, %p66
      %s69 = sadd.s32 %s68, 1
      %p72 = scmp.eq.s32.totalorder %s13, 1
      %p73 = scmp.ne.s32.totalorder %s68, %s70
      %p74 = scmp.eq.s32.totalorder %s13, 0
      %p75 = por %p73, %p74
      %p76 = scmp.ne.s32.totalorder %s68, %s70
      %p77 = scmp.eq.s32.totalorder %s18, 1
      %p78 = por %p76, %p77
      %p79 = scmp.ne.s32.totalorder %s70, %s71
      %p80 = scmp.eq.s32.totalorder %s18, 0
      %p81 = por %p79, %p80
      %p82 = scmp.ne.s32.totalorder %s70, %s71
      %p83 = scmp.eq.s32.totalorder %s19, 1
      %p84 = por %p82, %p83
      %p86 = scmp.ne.s32.totalorder %s71, %s85
      %p87 = scmp.eq.s32.totalorder %s19, 0
      %p88 = por %p86, %p87
      %s89 = ssub.s32 %s13, %s20
      %p90 = scmp.eq.s32.totalorder %s89, 0
      %s92 = sadd.s32 %s91, 1
      %s93 = scalar_select %p90, %s91, %s92
      %p96 = pneg %p90
      %p97 = scmp.eq.s32.totalorder %s13, 1
      %p98 = por %p96, %p97
      %p99 = scmp.ne.s32.totalorder %s91, %s94
      %p100 = scmp.eq.s32.totalorder %s13, 0
      %p101 = por %p99, %p100
      %p102 = scmp.ne.s32.totalorder %s91, %s94
      %p103 = scmp.eq.s32.totalorder %s18, 1
      %p104 = por %p102, %p103
      %p105 = scmp.ne.s32.totalorder %s94, %s95
      %p106 = scmp.eq.s32.totalorder %s18, 0
      %p107 = por %p105, %p106
      %p108 = scmp.ne.s32.totalorder %s94, %s95
      %p109 = scmp.eq.s32.totalorder %s19, 1
      %p110 = por %p108, %p109
      %p112 = scmp.ne.s32.totalorder %s95, %s111
      %p113 = scmp.eq.s32.totalorder %s19, 0
      %p114 = por %p112, %p113
      %p115 = scmp.le.s32.totalorder 1, %s13
      %p116 = scmp.lt.s32.totalorder %s13, 3
      %p117 = pnand %p115, %p116
      %p118 = pneg %p117
      // Predicated region
      $region9: #{tpu_custom_call.1} parent=5 // pred_check
        _
      $region10: #{tpu_custom_call.1} parent=5 // pred_check_branch
        %120 = sbr.rel (%p117) target = $region12
      $region11: #{tpu_custom_call.1} parent=5 // pred_region
        %s121 = ssub.s32 %s13, 1
        // Predicated region
        $region13: #{tpu_custom_call.1} parent=11 // pred_check
          %p122 = pneg %p60
        $region14: #{tpu_custom_call.1} parent=11 // pred_check_branch
          %124 = sbr.rel (%p122) target = $region16
        $region15: #{tpu_custom_call.1} parent=11 // pred_region
          %s126 = ssub.s32 128, 128
          %127 = vsyncadd [#allocation3], %s126
          %s129 = sshll.u32 [#allocation2], 4
          %s130 = int_to_ptr.vmem [resolvable:$true] %s129
          %132 = dma.hbm_to_vmem [thread:$0]  %s1, 128, %s130, [#allocation3]
        $region16: #{tpu_custom_call.1} parent=11 // pred_fallthru
          _
        // Predicated region
        $region17: #{tpu_custom_call.1} parent=11 // pred_check
          %p133 = pneg %p81
        $region18: #{tpu_custom_call.1} parent=11 // pred_check_branch
          %135 = sbr.rel (%p133) target = $region20
        $region19: #{tpu_custom_call.1} parent=11 // pred_region
          _
        $region20: #{tpu_custom_call.1} parent=11 // pred_fallthru
          _
      $region12: #{tpu_custom_call.1} parent=5 // pred_fallthru
        _
      %p136 = scmp.lt.s32.totalorder %s13, 2
      // Predicated region
      $region21: #{tpu_custom_call.1} parent=5 // pred_check
        %p137 = pneg %p136
      $region22: #{tpu_custom_call.1} parent=5 // pred_check_branch
        %139 = sbr.rel (%p137) target = $region24
      $region23: #{tpu_custom_call.1} parent=5 // pred_region
        // Predicated region
        $region25: #{tpu_custom_call.1} parent=23 // pred_check
          %p140 = pneg %p33
        $region26: #{tpu_custom_call.1} parent=23 // pred_check_branch
          %142 = sbr.rel (%p140) target = $region28
        $region27: #{tpu_custom_call.1} parent=23 // pred_region
          %p143 = scmp.lt.s32.totalorder %s13, 1
          %s144 = scalar_select %p143, %s13, 1
          %s145 = smul.addr %s144, 2
          %s146 = scalar_lea.vmem %s0, %s145
        $region28: #{tpu_custom_call.1} parent=23 // pred_fallthru
          _
      $region24: #{tpu_custom_call.1} parent=5 // pred_fallthru
        _
      %p147 = scmp.le.s32.totalorder 1, %s13
      %p148 = scmp.lt.s32.totalorder %s13, 3
      %p149 = pnand %p147, %p148
      %p150 = pneg %p149
      // Predicated region
      $region29: #{tpu_custom_call.1} parent=5 // pred_check
        _
      $region30: #{tpu_custom_call.1} parent=5 // pred_check_branch
        %152 = sbr.rel (%p149) target = $region32
      $region31: #{tpu_custom_call.1} parent=5 // pred_region
        %s153 = ssub.s32 %s13, 1
        // Predicated region
        $region33: #{tpu_custom_call.1} parent=31 // pred_check
          %p154 = pneg %p60
        $region34: #{tpu_custom_call.1} parent=31 // pred_check_branch
          %156 = sbr.rel (%p154) target = $region36
        $region35: #{tpu_custom_call.1} parent=31 // pred_region
          %157 = dma.done [#allocation3], 128
        $region36: #{tpu_custom_call.1} parent=31 // pred_fallthru
          _
        %p158 = scmp.lt.s32.totalorder %s18, 1
        %s159 = scalar_select %p158, %s18, 1
        %s160 = smul.addr %s159, 2
        %s161 = scalar_lea.vmem %s0, %s160
        %p162 = pneg %p39
        %p163 = pneg %p36
        %p164 = pneg %p60
        %p165 = pneg %p57
        %p166 = pneg %p81
        %p167 = pneg %p78
        %p168 = pneg %p107
        %p169 = pneg %p104
        %s170 = sand.u32 %s94, 1
        %s171 = scalar_lea.sflag [#allocation4], %s170
        %s172 = sand.u32 %s94, 1
        %s173 = smul.addr %s172, 2
        %s174 = scalar_lea.vmem [#allocation5], %s173
        %p175 = scmp.lt.s32.totalorder %s18, 1
        %s176 = scalar_select %p175, %s18, 1
        %s177 = smul.addr %s176, 2
        %s178 = scalar_lea.vmem %s0, %s177
        %v179 = vld [vmem:[%s178] sm:$0x3]
        %v180 = vlaneseq
        %v181 = vand.u32 %v180, 127
        %v182 = vshra.s32 %v181, 5
        %v183 = vand.u32 %v179, 255
        %v184 = vshra.s32 %v179, 8
        %v185 = vand.u32 %v184, 255
        %v186 = vshra.s32 %v179, 16
        %v187 = vand.u32 %v186, 255
        %v188 = vshra.s32 %v179, 24
        %v189 = vand.u32 %v188, 255
        %vm190 = vcmp.eq.s32.totalorder %v182, 0
        %vm191 = vcmp.eq.s32.totalorder %v182, 1
        %vm192 = vcmp.eq.s32.totalorder %v182, 2
        %v193 = vsel %vm192, 1, 0
        %vm194 = vcmp.eq.s32.totalorder %v193, 1
        %195 = vset.pattern.permute.xlu0 0
        %196 = vperm.xlu0 %195, %v187
        %v197 = vpop.permute.xlu0 %196
        %198 = vset.pattern.permute.xlu0 0
        %199 = vperm.xlu0 %198, %v189
        %v200 = vpop.permute.xlu0 %199
        %v201 = vsel %vm194, %v197, %v200
        %v202 = vsel %vm191, 1, 0
        %vm203 = vcmp.eq.s32.totalorder %v202, 1
        %204 = vset.pattern.permute.xlu0 0
        %205 = vperm.xlu0 %204, %v185
        %v206 = vpop.permute.xlu0 %205
        %v207 = vsel %vm203, %v206, %v201
        %v208 = vsel %vm190, 1, 0
        %vm209 = vcmp.eq.s32.totalorder %v208, 1
        %210 = vset.pattern.permute.xlu0 0
        %211 = vperm.xlu0 %210, %v183
        %v212 = vpop.permute.xlu0 %211
        %v213 = vsel %vm209, %v212, %v207
        %v214 = vand.u32 %v213, 1
        %vm215 = vcmp.ne.s32.totalorder %v214, 0
        %v216 = vand.u32 %v213, 2
        %vm217 = vcmp.ne.s32.totalorder %v216, 0
        %v218 = vand.u32 %v213, 4
        %vm219 = vcmp.ne.s32.totalorder %v218, 0
        %v220 = vld [vmem:[#allocation2] sm:$0xff]
        %v221 = vlaneseq
        %v222 = vshrl.u32 %v221, 7
        %v223 = vsub.s32 1, %v222
        %v224 = vrot.slane %v220, %v223
        %v225 = vlaneseq
        %v226 = vshrl.u32 %v225, 7
        %v227 = vsub.s32 0, %v226
        %v228 = vrot.slane %v220, %v227
        %v229 = vsel %vm215, %v224, %v228
        %v230 = vlaneseq
        %v231 = vshrl.u32 %v230, 7
        %v232 = vsub.s32 3, %v231
        %v233 = vrot.slane %v220, %v232
        %v234 = vlaneseq
        %v235 = vshrl.u32 %v234, 7
        %v236 = vsub.s32 2, %v235
        %v237 = vrot.slane %v220, %v236
        %v238 = vsel %vm215, %v233, %v237
        %v239 = vlaneseq
        %v240 = vshrl.u32 %v239, 7
        %v241 = vsub.s32 5, %v240
        %v242 = vrot.slane %v220, %v241
        %v243 = vlaneseq
        %v244 = vshrl.u32 %v243, 7
        %v245 = vsub.s32 4, %v244
        %v246 = vrot.slane %v220, %v245
        %v247 = vsel %vm215, %v242, %v246
        %v248 = vlaneseq
        %v249 = vshrl.u32 %v248, 7
        %v250 = vsub.s32 7, %v249
        %v251 = vrot.slane %v220, %v250
        %v252 = vlaneseq
        %v253 = vshrl.u32 %v252, 7
        %v254 = vsub.s32 6, %v253
        %v255 = vrot.slane %v220, %v254
        %v256 = vsel %vm215, %v251, %v255
        %v257 = vsel %vm217, %v238, %v229
        %v258 = vsel %vm217, %v256, %v247
        %v259 = vsel %vm219, %v258, %v257
        %v260 = vld [vmem:[%s2] sm:$0x3]
        %v261 = vadd.f32 %v259, %v260
        %262 = vst [vmem:[%s174] sm:$0x3] %v261
        %s263 = sand.u32 %s94, 1
        %s264 = scalar_lea.sflag [#allocation4], %s263
        %s265 = sand.u32 %s94, 1
        %s266 = smul.addr %s265, 2
        %s267 = scalar_lea.vmem [#allocation5], %s266
        // Predicated region
        $region37: #{tpu_custom_call.1} parent=31 // pred_check
          %p268 = pneg %p104
        $region38: #{tpu_custom_call.1} parent=31 // pred_check_branch
          %270 = sbr.rel (%p268) target = $region40
        $region39: #{tpu_custom_call.1} parent=31 // pred_region
          %s272 = ssub.s32 32, 32
          %273 = vsyncadd %s264, %s272
          %s274 = smul.addr %s18, 32
          %s275 = scalar_lea.hbm %s3, %s274
          %s277 = sshll.u32 %s267, 4
          %s278 = int_to_ptr.vmem [resolvable:$true] %s277
          %280 = dma.vmem_to_hbm [thread:$0]  %s278, 32, %s275, %s264
        $region40: #{tpu_custom_call.1} parent=31 // pred_fallthru
          _
      $region32: #{tpu_custom_call.1} parent=5 // pred_fallthru
        _
      %p281 = scmp.le.s32.totalorder 2, %s13
      // Predicated region
      $region41: #{tpu_custom_call.1} parent=5 // pred_check
        %p282 = pneg %p281
      $region42: #{tpu_custom_call.1} parent=5 // pred_check_branch
        %284 = sbr.rel (%p282) target = $region44
      $region43: #{tpu_custom_call.1} parent=5 // pred_region
        %s285 = ssub.s32 %s13, 2
        // Predicated region
        $region45: #{tpu_custom_call.1} parent=43 // pred_check
          %p286 = pneg %p110
        $region46: #{tpu_custom_call.1} parent=43 // pred_check_branch
          %288 = sbr.rel (%p286) target = $region48
        $region47: #{tpu_custom_call.1} parent=43 // pred_region
          %s289 = sand.u32 %s95, 1
          %s290 = scalar_lea.sflag [#allocation4], %s289
          %s291 = sand.u32 %s95, 1
          %s292 = smul.addr %s291, 2
          %s293 = scalar_lea.vmem [#allocation5], %s292
          %294 = dma.done %s290, 32
        $region48: #{tpu_custom_call.1} parent=43 // pred_fallthru
          _
      $region44: #{tpu_custom_call.1} parent=5 // pred_fallthru
        _
    $region6: #{tpu_custom_call.1} parent=1 // loop_footer
      %s17 = sadd.s32 1, %s13
    $region7: #{tpu_custom_call.1} parent=1 // loop_footer_branch
      %12 = sbr.rel target = $region3
    $region8: #{tpu_custom_call.1} parent=1 // loop_exit
      _
    %295 = vsyncpa [#allocation3], 1
    %s296 = scalar_lea.sflag [#allocation3], 1
    %297 = vsyncpa %s296, 1
    %298 = vsyncpa [#allocation4], 1
    %s299 = scalar_lea.sflag [#allocation4], 1
    %300 = vsyncpa %s299, 1

</llo_original>
